<compile_context>
chip_gen: v7x
topology: tpu7x:2x2x1
jax: 0.10.0
libtpu: 0.0.40
codegen_flags: <defaults>
</compile_context>

<pallas_src>
import functools

import jax
import jax.numpy as jnp
from jax.experimental import pallas as pl
from jax.experimental.pallas import tpu as pltpu

# Channel-count threshold below which the VPU FMA path beats the (padded) MXU.
_VPU_CHANNEL_LIMIT = 32


def _outconv_kernel(x_ref, w_ref, b_ref, o_ref):
    # x_ref: (1, Cin, THW)   one batch element, one spatial tile (lane-dense)
    # w_ref: (Cout, Cin)
    # b_ref: (Cout, 1)
    # o_ref: (1, Cout, THW)
    x = x_ref[0]          # (Cin, THW)
    w = w_ref[...]        # (Cout, Cin)
    b = b_ref[...]        # (Cout, 1)

    cin, thw = x.shape
    cout = w.shape[0]

    if cin <= _VPU_CHANNEL_LIMIT and cout <= _VPU_CHANNEL_LIMIT:
        # VPU path: unrolled multiply-accumulate over the (tiny) channel dim.
        # Everything stays lane-dense; no MXU padding / push-pop latency.
        acc = jnp.zeros((cout, thw), dtype=jnp.float32)
        for k in range(cin):  # static, small (e.g. 4) -> fully unrolled
            acc = acc + (w[:, k:k + 1].astype(jnp.float32)
                         * x[k:k + 1, :].astype(jnp.float32))
    else:
        # MXU path for real channel counts.
        acc = jnp.dot(w, x, preferred_element_type=jnp.float32)

    o_ref[0] = (acc + b.astype(jnp.float32)).astype(o_ref.dtype)


@functools.partial(jax.jit, static_argnames=("tile_hw",))
def out_conv(x_nchw, weight, bias, *, tile_hw=2048):
    """1x1 conv, stride 1, padding 0 (== nn.Conv2d(Cin, Cout, 1)).

    x_nchw: (N, Cin, H, W)
    weight: (Cout, Cin, 1, 1)   (PyTorch Conv2d layout)
    bias:   (Cout,)
    returns (N, Cout, H, W)
    """
    N, Cin, H, W = x_nchw.shape
    Cout = weight.shape[0]
    HW = H * W

    # Spatial tile: multiple of 128 lanes, capped by tile_hw (and by HW itself).
    hw_rounded = pl.cdiv(HW, 128) * 128
    THW = min(int(tile_hw), int(hw_rounded))
    THW = max(128, (THW // 128) * 128)
    HW_pad = pl.cdiv(HW, THW) * THW

    # Reshape-only glue (no transposes): NCHW -> (N, Cin, HW[_pad]).
    x3 = x_nchw.reshape(N, Cin, HW)
    if HW_pad != HW:
        x3 = jnp.pad(x3, ((0, 0), (0, 0), (0, HW_pad - HW)))
    w_mat = weight.reshape(Cout, Cin)      # (Cout, Cin)
    b_col = bias.reshape(Cout, 1)          # (Cout, 1)

    num_hw_tiles = HW_pad // THW
    itemsize = jnp.dtype(x_nchw.dtype).itemsize

    # VMEM budget: double-buffered x + out tiles, plus resident weight/bias.
    tile_bytes = (Cin + Cout) * THW * itemsize
    vmem_needed = 2 * 2 * tile_bytes + 2 * (Cout * Cin + Cout) * 4
    vmem_limit = int(min(max(2 * vmem_needed, 4 * 1024 * 1024), 32 * 1024 * 1024))

    cost = pl.CostEstimate(
        flops=2 * N * HW * Cin * Cout,
        transcendentals=0,
        bytes_accessed=itemsize * (N * HW_pad * (Cin + Cout)) + 4 * (Cout * Cin + Cout),
    )

    out3 = pl.pallas_call(
        _outconv_kernel,
        out_shape=jax.ShapeDtypeStruct((N, Cout, HW_pad), x_nchw.dtype),
        grid_spec=pltpu.PrefetchScalarGridSpec(
            num_scalar_prefetch=0,
            grid=(N, num_hw_tiles),
            in_specs=[
                # x: one batch element, one lane-dense spatial tile
                pl.BlockSpec((1, Cin, THW), lambda n, j: (n, 0, j)),
                # weight / bias: resident across the whole grid
                pl.BlockSpec((Cout, Cin), lambda n, j: (0, 0)),
                pl.BlockSpec((Cout, 1), lambda n, j: (0, 0)),
            ],
            out_specs=pl.BlockSpec((1, Cout, THW), lambda n, j: (n, 0, j)),
        ),
        compiler_params=pltpu.CompilerParams(
            dimension_semantics=("parallel", "parallel"),
            vmem_limit_bytes=vmem_limit,
        ),
        cost_estimate=cost,
    )(x3, w_mat, b_col)

    if HW_pad != HW:
        out3 = out3[:, :, :HW]
    return out3.reshape(N, Cout, H, W)


if __name__ == "__main__":
    key = jax.random.PRNGKey(0)
    k_x, k_w, k_b = jax.random.split(key, 3)

    N, Cin, Cout, H, W = 2, 4, 3, 16, 16

    x = jax.random.normal(k_x, (N, Cin, H, W), dtype=jnp.float32)
    # Deterministic synthetic parameters (PyTorch Conv2d shapes: (Cout, Cin, 1, 1), (Cout,))
    bound = 1.0 / (Cin ** 0.5)
    weight = jax.random.uniform(k_w, (Cout, Cin, 1, 1), dtype=jnp.float32,
                                minval=-bound, maxval=bound)
    bias = jax.random.uniform(k_b, (Cout,), dtype=jnp.float32,
                              minval=-bound, maxval=bound)

    out = out_conv(x, weight, bias)
    out = jax.block_until_ready(out)

    # Cross-check against pure-JAX reference (same math as nn.Conv2d 1x1).
    ref = jnp.einsum("nchw,oc->nohw", x, weight.reshape(Cout, Cin)) \
        + bias[None, :, None, None]
    assert out.shape == (N, Cout, H, W)
    assert jnp.allclose(out, ref, atol=1e-5), "mismatch vs reference"

    print("KERNEL_OK")
</pallas_src>

<mosaic_0001>
module attributes {stable_mosaic.version = 11 : i64} {
  func.func @_outconv_kernel(%arg0: i32, %arg1: i32, %arg2: memref<1x4x256xf32, #tpu.memory_space<vmem>>, %arg3: memref<3x4xf32, #tpu.memory_space<vmem>>, %arg4: memref<3x1xf32, #tpu.memory_space<vmem>>, %arg5: memref<1x3x256xf32, #tpu.memory_space<vmem>>) attributes {dimension_semantics = [#tpu.dimension_semantics<parallel>, #tpu.dimension_semantics<parallel>], iteration_bounds = array<i64: 2, 1>, scalar_prefetch = 0 : i64, scratch_operands = 0 : i64, tpu.core_type = #tpu.core_type<tc>, window_params = [{transform_indices = @transform_0, window_bounds = array<i64: 1, 4, 256>}, {pipeline_mode = #tpu.pipeline_mode<synchronous>, transform_indices = @transform_1, window_bounds = array<i64: 3, 4>}, {pipeline_mode = #tpu.pipeline_mode<synchronous>, transform_indices = @transform_2, window_bounds = array<i64: 3, 1>}, {transform_indices = @transform_3, window_bounds = array<i64: 1, 3, 256>}]} {
    %c0 = arith.constant 0 : index
    %c0_0 = arith.constant 0 : index
    %c0_1 = arith.constant 0 : index
    %0 = vector.load %arg2[%c0, %c0_0, %c0_1] : memref<1x4x256xf32, #tpu.memory_space<vmem>>, vector<1x4x256xf32>
    %1 = vector.shape_cast %0 : vector<1x4x256xf32> to vector<4x256xf32>
    %c0_2 = arith.constant 0 : index
    %c0_3 = arith.constant 0 : index
    %2 = vector.load %arg3[%c0_2, %c0_3] : memref<3x4xf32, #tpu.memory_space<vmem>>, vector<3x4xf32>
    %c0_4 = arith.constant 0 : index
    %c0_5 = arith.constant 0 : index
    %3 = vector.load %arg4[%c0_4, %c0_5] : memref<3x1xf32, #tpu.memory_space<vmem>>, vector<3x1xf32>
    %cst = arith.constant 0.000000e+00 : f32
    %4 = vector.broadcast %cst : f32 to vector<3x256xf32>
    %5 = vector.extract_strided_slice %2 {offsets = [0, 0], sizes = [3, 1], strides = [1, 1]} : vector<3x4xf32> to vector<3x1xf32>
    %6 = vector.extract_strided_slice %1 {offsets = [0, 0], sizes = [1, 256], strides = [1, 1]} : vector<4x256xf32> to vector<1x256xf32>
    %7 = vector.broadcast %5 : vector<3x1xf32> to vector<3x256xf32>
    %8 = vector.broadcast %6 : vector<1x256xf32> to vector<3x256xf32>
    %9 = arith.mulf %7, %8 : vector<3x256xf32>
    %10 = arith.addf %4, %9 : vector<3x256xf32>
    %11 = vector.extract_strided_slice %2 {offsets = [0, 1], sizes = [3, 1], strides = [1, 1]} : vector<3x4xf32> to vector<3x1xf32>
    %12 = vector.extract_strided_slice %1 {offsets = [1, 0], sizes = [1, 256], strides = [1, 1]} : vector<4x256xf32> to vector<1x256xf32>
    %13 = vector.broadcast %11 : vector<3x1xf32> to vector<3x256xf32>
    %14 = vector.broadcast %12 : vector<1x256xf32> to vector<3x256xf32>
    %15 = arith.mulf %13, %14 : vector<3x256xf32>
    %16 = arith.addf %10, %15 : vector<3x256xf32>
    %17 = vector.extract_strided_slice %2 {offsets = [0, 2], sizes = [3, 1], strides = [1, 1]} : vector<3x4xf32> to vector<3x1xf32>
    %18 = vector.extract_strided_slice %1 {offsets = [2, 0], sizes = [1, 256], strides = [1, 1]} : vector<4x256xf32> to vector<1x256xf32>
    %19 = vector.broadcast %17 : vector<3x1xf32> to vector<3x256xf32>
    %20 = vector.broadcast %18 : vector<1x256xf32> to vector<3x256xf32>
    %21 = arith.mulf %19, %20 : vector<3x256xf32>
    %22 = arith.addf %16, %21 : vector<3x256xf32>
    %23 = vector.extract_strided_slice %2 {offsets = [0, 3], sizes = [3, 1], strides = [1, 1]} : vector<3x4xf32> to vector<3x1xf32>
    %24 = vector.extract_strided_slice %1 {offsets = [3, 0], sizes = [1, 256], strides = [1, 1]} : vector<4x256xf32> to vector<1x256xf32>
    %25 = vector.broadcast %23 : vector<3x1xf32> to vector<3x256xf32>
    %26 = vector.broadcast %24 : vector<1x256xf32> to vector<3x256xf32>
    %27 = arith.mulf %25, %26 : vector<3x256xf32>
    %28 = arith.addf %22, %27 : vector<3x256xf32>
    %29 = vector.broadcast %3 : vector<3x1xf32> to vector<3x256xf32>
    %30 = arith.addf %28, %29 : vector<3x256xf32>
    %c0_6 = arith.constant 0 : index
    %c0_7 = arith.constant 0 : index
    %c0_8 = arith.constant 0 : index
    %31 = vector.load %arg5[%c0_6, %c0_7, %c0_8] : memref<1x3x256xf32, #tpu.memory_space<vmem>>, vector<1x3x256xf32>
    %32 = vector.shape_cast %31 : vector<1x3x256xf32> to vector<3x256xf32>
    %33 = vector.shape_cast %30 : vector<3x256xf32> to vector<1x3x256xf32>
    tpu.vector_store %arg5[%c0_6, %c0_7, %c0_8], %33 {strides = array<i32>} : memref<1x3x256xf32, #tpu.memory_space<vmem>>, vector<1x3x256xf32>,
    return
  }
  func.func @transform_0(%arg0: i32, %arg1: i32) -> (i32, i32, i32) {
    %c0_i32 = arith.constant 0 : i32
    %c0_i32_0 = arith.constant 0 : i32
    return %arg0, %c0_i32, %arg1 : i32, i32, i32
  }
  func.func @transform_1(%arg0: i32, %arg1: i32) -> (i32, i32) {
    %c0_i32 = arith.constant 0 : i32
    %c0_i32_0 = arith.constant 0 : i32
    %c0_i32_1 = arith.constant 0 : i32
    return %c0_i32, %c0_i32_0 : i32, i32
  }
  func.func @transform_2(%arg0: i32, %arg1: i32) -> (i32, i32) {
    %c0_i32 = arith.constant 0 : i32
    %c0_i32_0 = arith.constant 0 : i32
    %c0_i32_1 = arith.constant 0 : i32
    return %c0_i32, %c0_i32_0 : i32, i32
  }
  func.func @transform_3(%arg0: i32, %arg1: i32) -> (i32, i32, i32) {
    %c0_i32 = arith.constant 0 : i32
    %c0_i32_0 = arith.constant 0 : i32
    return %arg0, %c0_i32, %arg1 : i32, i32, i32
  }
}

</mosaic_0001>

<llo_original>
// kernel: out_conv.1
$region0: #{out_conv.1}
  #allocation0 [shape = 'u32[]', space=smem, size = 0x4, offset = 0x4, fixed_abs, tag = 'smem constant byte address 0x4 - core index']
  #allocation1 [shape = 'u32[144,128]{1,0:T(1,128)}', space=vmem, size = 0x12000, scoped, tag = 'internal scratch']
  %s0 = inlined_call_operand.vmem [shape: f32[2,4,256], index: 0, kind: input, shape index: {}]
  %s1 = inlined_call_operand.vmem [shape: f32[3,4], index: 1, kind: input, shape index: {}]
  %s2 = inlined_call_operand.vmem [shape: f32[3,1], index: 2, kind: input, shape index: {}]
  %s3 = inlined_call_operand.vmem [shape: f32[2,3,256], index: 3, kind: output, shape index: {}]
  %s4 = sld [smem:[#allocation0]]
  $region45: #{out_conv.1} parent=0
    _
  %s6 = ssub.s32 1, %s4
  %s7 = scalar_select 0, %s6, %s4
  loop: start=0, step=1, limit=4
  $region2: #{out_conv.1} parent=0 // loop_pre_header
    _
  $region3: #{out_conv.1} parent=0 // loop_header
    %s9 = sphi 0, %s13
    %p10 = scmp.ge.s32.totalorder %s9, 4
    %s16 = sphi 0, %s28
    %s17 = sphi 0, %s24
    %s18 = sphi 0, %s16
    %s19 = sphi 0, %s17
    %s20 = sphi 0, %s18
    %s21 = sphi 0, %s19
    %s33 = sphi 0, %s35
    %s36 = sphi 0, %s33
    %s37 = sphi 0, %s36
    %s53 = sphi 0, %s37
    %s57 = sphi 0, %s57
    %s59 = sphi 0, %s57
    %s60 = sphi 0, %s59
    %s74 = sphi 0, %s60
    %s78 = sphi 0, %s78
    %s80 = sphi 0, %s78
    %s81 = sphi 0, %s80
    %s95 = sphi 0, %s81
    %s103 = sphi 0, %s105
    %s106 = sphi 0, %s103
    %s107 = sphi 0, %s106
    %s123 = sphi 0, %s107
  $region4: #{out_conv.1} parent=0 // loop_header_branch
    %12 = sbr.rel (%p10) target = $region8
  $region5: #{out_conv.1} parent=0 // loop_body
    %s14 = ssub.s32 %s9, 1
    %s15 = ssub.s32 %s9, 2
    %s22 = sadd.s32 1, %s17
    %p23 = scmp.ge.s32.totalorder %s22, 1
    %s24 = scalar_select %p23, 0, %s22
    %s25 = sadd.s32 1, %s16
    %s26 = scalar_select %p23, %s25, %s16
    %p27 = scmp.ge.s32.totalorder %s26, 2
    %s28 = scalar_select %p27, 0, %s26
    %s29 = ssub.s32 %s16, %s28
    %s30 = ssub.s32 %s17, %s24
    %s31 = sor.u32 %s29, %s30
    %p32 = scmp.eq.s32.totalorder %s31, 0
    %s34 = sadd.s32 %s33, 1
    %s35 = scalar_select %p32, %s33, %s34
    %p38 = pneg %p32
    %p39 = scmp.eq.s32.totalorder %s9, 1
    %p40 = por %p38, %p39
    %p41 = scmp.ne.s32.totalorder %s33, %s36
    %p42 = scmp.eq.s32.totalorder %s9, 0
    %p43 = por %p41, %p42
    %p44 = scmp.ne.s32.totalorder %s33, %s36
    %p45 = scmp.eq.s32.totalorder %s14, 1
    %p46 = por %p44, %p45
    %p47 = scmp.ne.s32.totalorder %s36, %s37
    %p48 = scmp.eq.s32.totalorder %s14, 0
    %p49 = por %p47, %p48
    %p50 = scmp.ne.s32.totalorder %s36, %s37
    %p51 = scmp.eq.s32.totalorder %s15, 1
    %p52 = por %p50, %p51
    %p54 = scmp.ne.s32.totalorder %s37, %s53
    %p55 = scmp.eq.s32.totalorder %s15, 0
    %p56 = por %p54, %p55
    %s58 = sadd.s32 %s57, 1
    %p61 = scmp.eq.s32.totalorder %s9, 1
    %p62 = scmp.ne.s32.totalorder %s57, %s59
    %p63 = scmp.eq.s32.totalorder %s9, 0
    %p64 = por %p62, %p63
    %p65 = scmp.ne.s32.totalorder %s57, %s59
    %p66 = scmp.eq.s32.totalorder %s14, 1
    %p67 = por %p65, %p66
    %p68 = scmp.ne.s32.totalorder %s59, %s60
    %p69 = scmp.eq.s32.totalorder %s14, 0
    %p70 = por %p68, %p69
    %p71 = scmp.ne.s32.totalorder %s59, %s60
    %p72 = scmp.eq.s32.totalorder %s15, 1
    %p73 = por %p71, %p72
    %p75 = scmp.ne.s32.totalorder %s60, %s74
    %p76 = scmp.eq.s32.totalorder %s15, 0
    %p77 = por %p75, %p76
    %s79 = sadd.s32 %s78, 1
    %p82 = scmp.eq.s32.totalorder %s9, 1
    %p83 = scmp.ne.s32.totalorder %s78, %s80
    %p84 = scmp.eq.s32.totalorder %s9, 0
    %p85 = por %p83, %p84
    %p86 = scmp.ne.s32.totalorder %s78, %s80
    %p87 = scmp.eq.s32.totalorder %s14, 1
    %p88 = por %p86, %p87
    %p89 = scmp.ne.s32.totalorder %s80, %s81
    %p90 = scmp.eq.s32.totalorder %s14, 0
    %p91 = por %p89, %p90
    %p92 = scmp.ne.s32.totalorder %s80, %s81
    %p93 = scmp.eq.s32.totalorder %s15, 1
    %p94 = por %p92, %p93
    %p96 = scmp.ne.s32.totalorder %s81, %s95
    %p97 = scmp.eq.s32.totalorder %s15, 0
    %p98 = por %p96, %p97
    %s99 = ssub.s32 %s16, %s28
    %s100 = ssub.s32 %s17, %s24
    %s101 = sor.u32 %s99, %s100
    %p102 = scmp.eq.s32.totalorder %s101, 0
    %s104 = sadd.s32 %s103, 1
    %s105 = scalar_select %p102, %s103, %s104
    %p108 = pneg %p102
    %p109 = scmp.eq.s32.totalorder %s9, 1
    %p110 = por %p108, %p109
    %p111 = scmp.ne.s32.totalorder %s103, %s106
    %p112 = scmp.eq.s32.totalorder %s9, 0
    %p113 = por %p111, %p112
    %p114 = scmp.ne.s32.totalorder %s103, %s106
    %p115 = scmp.eq.s32.totalorder %s14, 1
    %p116 = por %p114, %p115
    %p117 = scmp.ne.s32.totalorder %s106, %s107
    %p118 = scmp.eq.s32.totalorder %s14, 0
    %p119 = por %p117, %p118
    %p120 = scmp.ne.s32.totalorder %s106, %s107
    %p121 = scmp.eq.s32.totalorder %s15, 1
    %p122 = por %p120, %p121
    %p124 = scmp.ne.s32.totalorder %s107, %s123
    %p125 = scmp.eq.s32.totalorder %s15, 0
    %p126 = por %p124, %p125
    %p127 = scmp.le.s32.totalorder 1, %s9
    %p128 = scmp.lt.s32.totalorder %s9, 3
    %p129 = pnand %p127, %p128
    %p130 = pneg %p129
    // Predicated region
    $region9: #{out_conv.1} parent=5 // pred_check
      _
    $region10: #{out_conv.1} parent=5 // pred_check_branch
      %132 = sbr.rel (%p129) target = $region12
    $region11: #{out_conv.1} parent=5 // pred_region
      %s133 = ssub.s32 %s9, 1
      // Predicated region
      $region13: #{out_conv.1} parent=11 // pred_check
        %p134 = pneg %p70
      $region14: #{out_conv.1} parent=11 // pred_check_branch
        %136 = sbr.rel (%p134) target = $region16
      $region15: #{out_conv.1} parent=11 // pred_region
        _
      $region16: #{out_conv.1} parent=11 // pred_fallthru
        _
      // Predicated region
      $region17: #{out_conv.1} parent=11 // pred_check
        %p137 = pneg %p91
      $region18: #{out_conv.1} parent=11 // pred_check_branch
        %139 = sbr.rel (%p137) target = $region20
      $region19: #{out_conv.1} parent=11 // pred_region
        _
      $region20: #{out_conv.1} parent=11 // pred_fallthru
        _
    $region12: #{out_conv.1} parent=5 // pred_fallthru
      _
    %p140 = scmp.lt.s32.totalorder %s9, 2
    // Predicated region
    $region21: #{out_conv.1} parent=5 // pred_check
      %p141 = pneg %p140
    $region22: #{out_conv.1} parent=5 // pred_check_branch
      %143 = sbr.rel (%p141) target = $region24
    $region23: #{out_conv.1} parent=5 // pred_region
      // Predicated region
      $region25: #{out_conv.1} parent=23 // pred_check
        %p144 = pneg %p43
      $region26: #{out_conv.1} parent=23 // pred_check_branch
        %146 = sbr.rel (%p144) target = $region28
      $region27: #{out_conv.1} parent=23 // pred_region
        %s147 = smul.u32 2, %s17
        %p148 = scmp.lt.s32.totalorder %s16, 1
        %s149 = scalar_select %p148, %s16, 1
        %p150 = scmp.lt.s32.totalorder %s147, 1
        %s151 = scalar_select %p150, %s147, 1
        %s152 = smul.addr %s149, 2
        %s153 = sadd.s32 %s151, %s152
        %s154 = smul.addr %s153, 4
        %s155 = scalar_lea.vmem %s0, %s154
        %s156 = smul.u32 2, %s17
      $region28: #{out_conv.1} parent=23 // pred_fallthru
        _
    $region24: #{out_conv.1} parent=5 // pred_fallthru
      _
    %p157 = scmp.le.s32.totalorder 1, %s9
    %p158 = scmp.lt.s32.totalorder %s9, 3
    %p159 = pnand %p157, %p158
    %p160 = pneg %p159
    // Predicated region
    $region29: #{out_conv.1} parent=5 // pred_check
      _
    $region30: #{out_conv.1} parent=5 // pred_check_branch
      %162 = sbr.rel (%p159) target = $region32
    $region31: #{out_conv.1} parent=5 // pred_region
      %s163 = ssub.s32 %s9, 1
      %s164 = smul.u32 2, %s19
      %p165 = scmp.lt.s32.totalorder %s18, 1
      %s166 = scalar_select %p165, %s18, 1
      %p167 = scmp.lt.s32.totalorder %s164, 1
      %s168 = scalar_select %p167, %s164, 1
      %s169 = smul.addr %s166, 2
      %s170 = sadd.s32 %s168, %s169
      %s171 = smul.addr %s170, 4
      %s172 = scalar_lea.vmem %s0, %s171
      %p173 = pneg %p49
      %p174 = pneg %p46
      %p175 = pneg %p70
      %p176 = pneg %p67
      %p177 = pneg %p91
      %p178 = pneg %p88
      %p179 = pneg %p119
      %p180 = pneg %p116
      %s181 = smul.u32 2, %s19
      %p182 = scmp.lt.s32.totalorder %s18, 1
      %s183 = scalar_select %p182, %s18, 1
      %p184 = scmp.lt.s32.totalorder %s181, 1
      %s185 = scalar_select %p184, %s181, 1
      %s186 = smul.addr %s183, 2
      %s187 = sadd.s32 %s185, %s186
      %s188 = smul.addr %s187, 4
      %s189 = scalar_lea.vmem %s3, %s188
      %s190 = smul.u32 2, %s19
      %p191 = scmp.lt.s32.totalorder %s18, 1
      %s192 = scalar_select %p191, %s18, 1
      %p193 = scmp.lt.s32.totalorder %s190, 1
      %s194 = scalar_select %p193, %s190, 1
      %s195 = smul.addr %s192, 2
      %s196 = sadd.s32 %s194, %s195
      %s197 = smul.addr %s196, 4
      %s198 = scalar_lea.vmem %s0, %s197
      %s199 = smul.u32 2, %s19
      %s200 = smul.u32 2, %s19
      %p201 = scmp.lt.s32.totalorder %s18, 1
      %s202 = scalar_select %p201, %s18, 1
      %p203 = scmp.lt.s32.totalorder %s200, 1
      %s204 = scalar_select %p203, %s200, 1
      %s205 = smul.addr %s202, 2
      %s206 = sadd.s32 %s204, %s205
      %s207 = smul.addr %s206, 4
      %s208 = scalar_lea.vmem %s3, %s207
      %s209 = smul.u32 2, %s19
      %v210 = vld [vmem:[%s198] sm:$0xff]
      %v211 = vld [vmem:[%s1] sm:$0x7]
      %v212 = vld [vmem:[%s2] sm:$0x7]
      %214 = vset.pattern.permute.xlu0 0
      %215 = vperm.xlu0 %214, %v211
      %v216 = vpop.permute.xlu0 %215
      %v219 = vlaneseq
      %v220 = vshrl.u32 %v219, 7
      %v221 = vsub.s32 0, %v220
      %v222 = vrot.slane %v210, %v221
      %v223 = vlaneseq
      %v224 = vshrl.u32 %v223, 7
      %v225 = vsub.s32 4, %v224
      %v226 = vrot.slane %v210, %v225
      %v229 = vlaneseq
      %v230 = vshrl.u32 %v229, 7
      %v231 = vsub.s32 0, %v230
      %v232 = vrot.slane %v222, %v231
      %v233 = vlaneseq
      %v234 = vshrl.u32 %v233, 7
      %v235 = vsub.s32 0, %v234
      %v236 = vrot.slane %v226, %v235
      %v237 = vmul.f32 %v216, %v232
      %v238 = vmul.f32 %v216, %v236
      %v239 = vadd.f32 %v237, 0.0
      %v240 = vadd.f32 %v238, 0.0
      %241 = vset.pattern.permute.xlu0 1
      %242 = vperm.xlu0 %241, %v211
      %v243 = vpop.permute.xlu0 %242
      %v245 = vlaneseq
      %v246 = vshrl.u32 %v245, 7
      %v247 = vsub.s32 1, %v246
      %v248 = vrot.slane %v210, %v247
      %v249 = vlaneseq
      %v250 = vshrl.u32 %v249, 7
      %v251 = vsub.s32 5, %v250
      %v252 = vrot.slane %v210, %v251
      %v255 = vlaneseq
      %v256 = vshrl.u32 %v255, 7
      %v257 = vsub.s32 1, %v256
      %v258 = vrot.slane %v248, %v257
      %v259 = vlaneseq
      %v260 = vshrl.u32 %v259, 7
      %v261 = vsub.s32 1, %v260
      %v262 = vrot.slane %v252, %v261
      %v263 = vmul.f32 %v243, %v258
      %v264 = vmul.f32 %v243, %v262
      %v265 = vadd.f32 %v239, %v263
      %v266 = vadd.f32 %v240, %v264
      %267 = vset.pattern.permute.xlu0 2
      %268 = vperm.xlu0 %267, %v211
      %v269 = vpop.permute.xlu0 %268
      %v271 = vlaneseq
      %v272 = vshrl.u32 %v271, 7
      %v273 = vsub.s32 2, %v272
      %v274 = vrot.slane %v210, %v273
      %v275 = vlaneseq
      %v276 = vshrl.u32 %v275, 7
      %v277 = vsub.s32 6, %v276
      %v278 = vrot.slane %v210, %v277
      %v281 = vlaneseq
      %v282 = vshrl.u32 %v281, 7
      %v283 = vsub.s32 2, %v282
      %v284 = vrot.slane %v274, %v283
      %v285 = vlaneseq
      %v286 = vshrl.u32 %v285, 7
      %v287 = vsub.s32 2, %v286
      %v288 = vrot.slane %v278, %v287
      %v289 = vmul.f32 %v269, %v284
      %v290 = vmul.f32 %v269, %v288
      %v291 = vadd.f32 %v265, %v289
      %v292 = vadd.f32 %v266, %v290
      %293 = vset.pattern.permute.xlu0 3
      %294 = vperm.xlu0 %293, %v211
      %v295 = vpop.permute.xlu0 %294
      %v297 = vlaneseq
      %v298 = vshrl.u32 %v297, 7
      %v299 = vsub.s32 3, %v298
      %v300 = vrot.slane %v210, %v299
      %v301 = vlaneseq
      %v302 = vshrl.u32 %v301, 7
      %v303 = vsub.s32 7, %v302
      %v304 = vrot.slane %v210, %v303
      %v307 = vlaneseq
      %v308 = vshrl.u32 %v307, 7
      %v309 = vsub.s32 3, %v308
      %v310 = vrot.slane %v300, %v309
      %v311 = vlaneseq
      %v312 = vshrl.u32 %v311, 7
      %v313 = vsub.s32 3, %v312
      %v314 = vrot.slane %v304, %v313
      %v315 = vmul.f32 %v295, %v310
      %v316 = vmul.f32 %v295, %v314
      %v317 = vadd.f32 %v291, %v315
      %v318 = vadd.f32 %v292, %v316
      %320 = vset.pattern.permute.xlu0 0
      %321 = vperm.xlu0 %320, %v212
      %v322 = vpop.permute.xlu0 %321
      %v324 = vadd.f32 %v317, %v322
      %v325 = vadd.f32 %v318, %v322
      %v328 = vcombine.low %v324, %v325
      %330 = vst [vmem:[%s208] sm:$0x77] %v328
      %s331 = smul.u32 2, %s19
      %p332 = scmp.lt.s32.totalorder %s18, 1
      %s333 = scalar_select %p332, %s18, 1
      %p334 = scmp.lt.s32.totalorder %s331, 1
      %s335 = scalar_select %p334, %s331, 1
      %s336 = smul.addr %s333, 2
      %s337 = sadd.s32 %s335, %s336
      %s338 = smul.addr %s337, 4
      %s339 = scalar_lea.vmem %s3, %s338
      // Predicated region
      $region33: #{out_conv.1} parent=31 // pred_check
        %p340 = pneg %p116
      $region34: #{out_conv.1} parent=31 // pred_check_branch
        %342 = sbr.rel (%p340) target = $region36
      $region35: #{out_conv.1} parent=31 // pred_region
        %s343 = smul.u32 2, %s19
      $region36: #{out_conv.1} parent=31 // pred_fallthru
        _
    $region32: #{out_conv.1} parent=5 // pred_fallthru
      _
    %p344 = scmp.le.s32.totalorder 2, %s9
    // Predicated region
    $region37: #{out_conv.1} parent=5 // pred_check
      %p345 = pneg %p344
    $region38: #{out_conv.1} parent=5 // pred_check_branch
      %347 = sbr.rel (%p345) target = $region40
    $region39: #{out_conv.1} parent=5 // pred_region
      %s348 = ssub.s32 %s9, 2
      // Predicated region
      $region41: #{out_conv.1} parent=39 // pred_check
        %p349 = pneg %p122
      $region42: #{out_conv.1} parent=39 // pred_check_branch
        %351 = sbr.rel (%p349) target = $region44
      $region43: #{out_conv.1} parent=39 // pred_region
        %s352 = smul.u32 2, %s21
        %p353 = scmp.lt.s32.totalorder %s20, 1
        %s354 = scalar_select %p353, %s20, 1
        %p355 = scmp.lt.s32.totalorder %s352, 1
        %s356 = scalar_select %p355, %s352, 1
        %s357 = smul.addr %s354, 2
        %s358 = sadd.s32 %s356, %s357
        %s359 = smul.addr %s358, 4
        %s360 = scalar_lea.vmem %s3, %s359
      $region44: #{out_conv.1} parent=39 // pred_fallthru
        _
    $region40: #{out_conv.1} parent=5 // pred_fallthru
      _
  $region6: #{out_conv.1} parent=0 // loop_footer
    %s13 = sadd.s32 1, %s9
  $region7: #{out_conv.1} parent=0 // loop_footer_branch
    %8 = sbr.rel target = $region3
  $region8: #{out_conv.1} parent=0 // loop_exit
    _

</llo_original>
